<compile_context>
chip_gen: v7x
topology: tpu7x:2x2x1
jax: 0.10.0
libtpu: 0.0.40
codegen_flags: <defaults>
</compile_context>

<pallas_src>
import functools

import jax
import jax.numpy as jnp
from jax.experimental import pallas as pl
from jax.experimental.pallas import tpu as pltpu


def inv_layer_kernel(l0_ref, w_in_ref, w_res_t_ref, w_out_t_ref, b_ref,
                     o_ref, acc_ref):
    k = pl.program_id(0)
    tn = w_in_ref.shape[0]            # static tile size along E
    dn_tt = (((1,), (1,)), ((), ()))  # LHS dim1 . RHS dim1  (W_in in (out,in))
    dn_nn = (((1,), (0,)), ((), ()))  # LHS dim1 . RHS dim0  (pre-transposed)

    @pl.when(k == 0)
    def _init():
        # Seed the accumulator with the output_layer bias (f32).
        acc_ref[...] = b_ref[...].astype(jnp.float32)

    l0_full = l0_ref[...]                         # (1, E)  bf16
    start = pl.multiple_of(k * tn, tn)            # lane-aligned tile start
    l0_tile = l0_ref[:, pl.ds(start, tn)]         # (1, tn) bf16

    # l1_k = relu(l0 @ W_in[rows k, :].T)  -> the k-th column tile of l1.
    # (ReLU is elementwise, so tiling l1's columns together with the
    #  contraction rows of W_out^T / W_res^T by the same index is exact.)
    l1_k = jnp.maximum(
        jax.lax.dot_general(l0_full, w_in_ref[...], dn_tt,
                            preferred_element_type=jnp.float32),
        0.0,
    ).astype(jnp.bfloat16)                        # (1, tn)

    # lout += l1_k @ W_out^T[rows k, :] + l0[:, cols k] @ W_res^T[rows k, :]
    acc_ref[...] += (
        jax.lax.dot_general(l1_k, w_out_t_ref[...], dn_nn,
                            preferred_element_type=jnp.float32)
        + jax.lax.dot_general(l0_tile, w_res_t_ref[...], dn_nn,
                              preferred_element_type=jnp.float32)
    )

    @pl.when(k == pl.num_programs(0) - 1)
    def _finalize():
        lout = acc_ref[...]
        norm2 = jnp.sum(lout * lout, axis=1, keepdims=True)
        # rsqrt(max(norm^2, 1e-24)) == 1 / max(norm, 1e-12)  (F.normalize eps)
        inv = jax.lax.rsqrt(jnp.maximum(norm2, 1e-24))
        o_ref[...] = (lout * inv).astype(o_ref.dtype)


def _vmem_capacity_bytes():
    """Physical VMEM of the current generation (128 MiB v5e/v6e, 64 MiB v7x)."""
    try:
        info = pltpu.get_tpu_info()
        cap = int(getattr(info, "vmem_capacity_bytes", 0))
        if cap > 0:
            return cap
    except Exception:
        pass
    return 64 << 20   # conservative default (v7x per-TC VMEM)


def _pick_tile(E, vmem_cap):
    """Largest divisor tile of E whose double-buffered bf16 weight tiles
    (2 bufs x 3 weights x tn x E x 2B = 12*E*tn bytes) fit a ~40% VMEM budget,
    after accounting for the small resident l0 / bias / acc / output blocks."""
    fixed = 16 * E + (64 << 10)                 # residents + slack
    budget = max((2 * vmem_cap) // 5 - fixed, 0)
    for cand in (2048, 1024, 512, 384, 256, 128):
        if E % cand == 0 and 12 * E * cand <= budget:
            return cand
    raise ValueError(
        f"e_dim={E} too large for the VMEM weight-tile budget ({budget} B); "
        "add a finer weight tiling along the output dimension.")


@functools.partial(jax.jit, static_argnames=("tn",))
def inv_layer(x, w_in_b, w_res_t_b, w_out_t_b, b_out, *, tn=None):
    """invLayer forward.

    x:         (N, E) activations.
    w_in_b:    (E, E) bf16, PyTorch (out, in) layout (input_layer.weight).
    w_res_t_b: (E, E) bf16, PRE-TRANSPOSED (in, out) layout (residual_layer.weight.T).
    w_out_t_b: (E, E) bf16, PRE-TRANSPOSED (in, out) layout (output_layer.weight.T).
    b_out:     (E,)  output_layer.bias.
    """
    N, E = x.shape
    assert E % 128 == 0, "e_dim must be a multiple of 128 for lane tiling"

    vmem_cap = _vmem_capacity_bytes()
    if tn is None:
        tn = _pick_tile(E, vmem_cap)
    num_tiles = E // tn

    # l0 = mean(x, dim=0) in plain XLA (tiny) -- keeps x out of kernel VMEM.
    l0 = jnp.mean(x.astype(jnp.float32), axis=0, keepdims=True)
    l0_b = l0.astype(jnp.bfloat16)                       # (1, E) MXU LHS
    b2 = b_out.reshape(1, E).astype(jnp.float32)

    cost = pl.CostEstimate(
        flops=6 * E * E + 4 * E,
        transcendentals=1,
        bytes_accessed=3 * E * E * 2 + E * (2 + 4 + 4),
    )

    return pl.pallas_call(
        inv_layer_kernel,
        out_shape=jax.ShapeDtypeStruct((1, E), x.dtype),
        grid_spec=pltpu.PrefetchScalarGridSpec(
            num_scalar_prefetch=0,
            grid=(num_tiles,),
            in_specs=[
                pl.BlockSpec((1, E), lambda k: (0, 0)),     # l0 (tiny, resident)
                pl.BlockSpec((tn, E), lambda k: (k, 0)),    # W_in    row tile
                pl.BlockSpec((tn, E), lambda k: (k, 0)),    # W_res^T row tile
                pl.BlockSpec((tn, E), lambda k: (k, 0)),    # W_out^T row tile
                pl.BlockSpec((1, E), lambda k: (0, 0)),     # bias (tiny, resident)
            ],
            out_specs=pl.BlockSpec((1, E), lambda k: (0, 0)),
            scratch_shapes=[
                pltpu.VMEM((1, E), jnp.float32),            # lout accumulator
            ],
        ),
        compiler_params=pltpu.CompilerParams(
            dimension_semantics=("arbitrary",),
            vmem_limit_bytes=int(vmem_cap * 3 // 4),
        ),
        cost_estimate=cost,
    )(l0_b, w_in_b, w_res_t_b, w_out_t_b, b2)


if __name__ == "__main__":
    E_DIM = 128   # e_dim from the module default
    N = 8         # rows averaged by torch.mean(x, dim=0)

    key = jax.random.PRNGKey(0)
    kx, k1, k2, k3, k4 = jax.random.split(key, 5)

    x = jax.random.normal(kx, (N, E_DIM), dtype=jnp.float32)
    bound = 1.0 / (E_DIM ** 0.5)
    w_in = jax.random.uniform(k1, (E_DIM, E_DIM), jnp.float32, -bound, bound)
    w_res = jax.random.uniform(k2, (E_DIM, E_DIM), jnp.float32, -bound, bound)
    w_out = jax.random.uniform(k3, (E_DIM, E_DIM), jnp.float32, -bound, bound)
    b_out = jax.random.uniform(k4, (E_DIM,), jnp.float32, -bound, bound)

    # Parameter-init-time transforms (done ONCE, outside the hot path):
    #   * quantize weights to bf16 (halves per-call weight HBM traffic),
    #   * pre-transpose W_res / W_out to (in, out) so the kernel streams them
    #     as contiguous row tiles.
    w_in_b = w_in.astype(jnp.bfloat16)                 # (out, in)
    w_res_t_b = w_res.T.astype(jnp.bfloat16)           # (in, out)
    w_out_t_b = w_out.T.astype(jnp.bfloat16)           # (in, out)

    out = inv_layer(x, w_in_b, w_res_t_b, w_out_t_b, b_out)
    out = jax.block_until_ready(out)

    # Pure-JAX f32 reference (PyTorch semantics).
    l0 = jnp.mean(x, axis=0, keepdims=True)
    l1 = jax.nn.relu(l0 @ w_in.T)
    lout = l0 @ w_res.T + (l1 @ w_out.T + b_out)
    ref = lout / jnp.maximum(jnp.linalg.norm(lout, axis=1, keepdims=True), 1e-12)

    assert out.shape == (1, E_DIM)
    # bf16 weights / bf16 l0 LHS -> loosened tolerance vs the f32 reference.
    assert jnp.allclose(out, ref, atol=2e-2, rtol=2e-2), float(
        jnp.max(jnp.abs(out - ref)))

    print("KERNEL_OK")
</pallas_src>

<mosaic_0001>
module attributes {stable_mosaic.version = 11 : i64} {
  func.func @inv_layer_kernel(%arg0: i32, %arg1: memref<1x128xbf16, #tpu.memory_space<vmem>>, %arg2: memref<128x128xbf16, #tpu.memory_space<vmem>>, %arg3: memref<128x128xbf16, #tpu.memory_space<vmem>>, %arg4: memref<128x128xbf16, #tpu.memory_space<vmem>>, %arg5: memref<1x128xf32, #tpu.memory_space<vmem>>, %arg6: memref<1x128xf32, #tpu.memory_space<vmem>>, %arg7: memref<1x128xf32, #tpu.memory_space<vmem>>) attributes {dimension_semantics = [#tpu.dimension_semantics<arbitrary>], iteration_bounds = array<i64: 1>, scalar_prefetch = 0 : i64, scratch_operands = 1 : i64, tpu.core_type = #tpu.core_type<tc>, window_params = [{pipeline_mode = #tpu.pipeline_mode<synchronous>, transform_indices = @transform_0, window_bounds = array<i64: 1, 128>}, {transform_indices = @transform_1, window_bounds = array<i64: 128, 128>}, {transform_indices = @transform_2, window_bounds = array<i64: 128, 128>}, {transform_indices = @transform_3, window_bounds = array<i64: 128, 128>}, {pipeline_mode = #tpu.pipeline_mode<synchronous>, transform_indices = @transform_4, window_bounds = array<i64: 1, 128>}, {pipeline_mode = #tpu.pipeline_mode<synchronous>, transform_indices = @transform_5, window_bounds = array<i64: 1, 128>}]} {
    %c0_i32 = arith.constant 0 : i32
    %0 = arith.cmpi eq, %arg0, %c0_i32 : i32
    %1 = arith.extui %0 : i1 to i32
    %c0_i32_0 = arith.constant 0 : i32
    %2 = arith.cmpi ne, %1, %c0_i32_0 : i32
    scf.if %2 {
      %c0_18 = arith.constant 0 : index
      %c0_19 = arith.constant 0 : index
      %24 = vector.load %arg5[%c0_18, %c0_19] : memref<1x128xf32, #tpu.memory_space<vmem>>, vector<1x128xf32>
      %c0_20 = arith.constant 0 : index
      %c0_21 = arith.constant 0 : index
      %25 = vector.load %arg7[%c0_20, %c0_21] : memref<1x128xf32, #tpu.memory_space<vmem>>, vector<1x128xf32>
      tpu.vector_store %arg7[%c0_20, %c0_21], %24 {strides = array<i32>} : memref<1x128xf32, #tpu.memory_space<vmem>>, vector<1x128xf32>,
    } else {
    }
    %c0 = arith.constant 0 : index
    %c0_1 = arith.constant 0 : index
    %3 = vector.load %arg1[%c0, %c0_1] : memref<1x128xbf16, #tpu.memory_space<vmem>>, vector<1x128xbf16>
    %c128_i32 = arith.constant 128 : i32
    %4 = arith.muli %arg0, %c128_i32 : i32
    %5 = tpu.assume_multiple %4, 128 : i32
    %c0_2 = arith.constant 0 : index
    %6 = arith.index_cast %5 : i32 to index
    %7 = vector.load %arg1[%c0_2, %6] : memref<1x128xbf16, #tpu.memory_space<vmem>>, vector<1x128xbf16>
    %c0_3 = arith.constant 0 : index
    %c0_4 = arith.constant 0 : index
    %8 = vector.load %arg2[%c0_3, %c0_4] : memref<128x128xbf16, #tpu.memory_space<vmem>>, vector<128x128xbf16>
    %cst = arith.constant dense<0.000000e+00> : vector<1x128xf32>
    %9 = tpu.matmul %3, %8, %cst {dimension_numbers = #tpu.dot_dimension_numbers<[1], [1], [0], [0], [0, 0, 1, 0], [], []>} : vector<1x128xbf16>, vector<128x128xbf16>, vector<1x128xf32> -> vector<1x128xf32>
    %cst_5 = arith.constant 0.000000e+00 : f32
    %10 = vector.broadcast %cst_5 : f32 to vector<1x128xf32>
    %11 = arith.maximumf %9, %10 : vector<1x128xf32>
    %12 = arith.truncf %11 : vector<1x128xf32> to vector<1x128xbf16>
    %c0_6 = arith.constant 0 : index
    %c0_7 = arith.constant 0 : index
    %13 = vector.load %arg7[%c0_6, %c0_7] : memref<1x128xf32, #tpu.memory_space<vmem>>, vector<1x128xf32>
    %c0_8 = arith.constant 0 : index
    %c0_9 = arith.constant 0 : index
    %14 = vector.load %arg4[%c0_8, %c0_9] : memref<128x128xbf16, #tpu.memory_space<vmem>>, vector<128x128xbf16>
    %cst_10 = arith.constant dense<0.000000e+00> : vector<1x128xf32>
    %15 = tpu.matmul %12, %14, %cst_10 {dimension_numbers = #tpu.dot_dimension_numbers<[1], [0], [0], [1], [0, 0, 1, 1], [], []>} : vector<1x128xbf16>, vector<128x128xbf16>, vector<1x128xf32> -> vector<1x128xf32>
    %c0_11 = arith.constant 0 : index
    %c0_12 = arith.constant 0 : index
    %16 = vector.load %arg3[%c0_11, %c0_12] : memref<128x128xbf16, #tpu.memory_space<vmem>>, vector<128x128xbf16>
    %cst_13 = arith.constant dense<0.000000e+00> : vector<1x128xf32>
    %17 = tpu.matmul %7, %16, %cst_13 {dimension_numbers = #tpu.dot_dimension_numbers<[1], [0], [0], [1], [0, 0, 1, 1], [], []>} : vector<1x128xbf16>, vector<128x128xbf16>, vector<1x128xf32> -> vector<1x128xf32>
    %18 = arith.addf %15, %17 : vector<1x128xf32>
    %19 = arith.addf %13, %18 : vector<1x128xf32>
    %c0_14 = arith.constant 0 : index
    %c0_15 = arith.constant 0 : index
    %20 = vector.load %arg7[%c0_14, %c0_15] : memref<1x128xf32, #tpu.memory_space<vmem>>, vector<1x128xf32>
    tpu.vector_store %arg7[%c0_14, %c0_15], %19 {strides = array<i32>} : memref<1x128xf32, #tpu.memory_space<vmem>>, vector<1x128xf32>,
    %c0_i32_16 = arith.constant 0 : i32
    %21 = arith.cmpi eq, %arg0, %c0_i32_16 : i32
    %22 = arith.extui %21 : i1 to i32
    %c0_i32_17 = arith.constant 0 : i32
    %23 = arith.cmpi ne, %22, %c0_i32_17 : i32
    scf.if %23 {
      %c0_18 = arith.constant 0 : index
      %c0_19 = arith.constant 0 : index
      %24 = vector.load %arg7[%c0_18, %c0_19] : memref<1x128xf32, #tpu.memory_space<vmem>>, vector<1x128xf32>
      %25 = arith.mulf %24, %24 : vector<1x128xf32>
      %cst_20 = arith.constant dense<0.000000e+00> : vector<1xf32>
      %26 = vector.multi_reduction <add>, %25, %cst_20 [1] : vector<1x128xf32> to vector<1xf32>
      %27 = vector.shape_cast %26 : vector<1xf32> to vector<1x1xf32>
      %cst_21 = arith.constant 1.000000e-24 : f32
      %28 = vector.broadcast %cst_21 : f32 to vector<1x1xf32>
      %29 = arith.maximumf %27, %28 : vector<1x1xf32>
      %30 = math.rsqrt %29 : vector<1x1xf32>
      %31 = vector.broadcast %30 : vector<1x1xf32> to vector<1x128xf32>
      %32 = arith.mulf %24, %31 : vector<1x128xf32>
      %c0_22 = arith.constant 0 : index
      %c0_23 = arith.constant 0 : index
      %33 = vector.load %arg6[%c0_22, %c0_23] : memref<1x128xf32, #tpu.memory_space<vmem>>, vector<1x128xf32>
      tpu.vector_store %arg6[%c0_22, %c0_23], %32 {strides = array<i32>} : memref<1x128xf32, #tpu.memory_space<vmem>>, vector<1x128xf32>,
    } else {
    }
    return
  }
  func.func @transform_0(%arg0: i32) -> (i32, i32) {
    %c0_i32 = arith.constant 0 : i32
    %c0_i32_0 = arith.constant 0 : i32
    %c0_i32_1 = arith.constant 0 : i32
    return %c0_i32, %c0_i32_0 : i32, i32
  }
  func.func @transform_1(%arg0: i32) -> (i32, i32) {
    %c0_i32 = arith.constant 0 : i32
    %c0_i32_0 = arith.constant 0 : i32
    return %arg0, %c0_i32 : i32, i32
  }
  func.func @transform_2(%arg0: i32) -> (i32, i32) {
    %c0_i32 = arith.constant 0 : i32
    %c0_i32_0 = arith.constant 0 : i32
    return %arg0, %c0_i32 : i32, i32
  }
  func.func @transform_3(%arg0: i32) -> (i32, i32) {
    %c0_i32 = arith.constant 0 : i32
    %c0_i32_0 = arith.constant 0 : i32
    return %arg0, %c0_i32 : i32, i32
  }
  func.func @transform_4(%arg0: i32) -> (i32, i32) {
    %c0_i32 = arith.constant 0 : i32
    %c0_i32_0 = arith.constant 0 : i32
    %c0_i32_1 = arith.constant 0 : i32
    return %c0_i32, %c0_i32_0 : i32, i32
  }
  func.func @transform_5(%arg0: i32) -> (i32, i32) {
    %c0_i32 = arith.constant 0 : i32
    %c0_i32_0 = arith.constant 0 : i32
    %c0_i32_1 = arith.constant 0 : i32
    return %c0_i32, %c0_i32_0 : i32, i32
  }
}

</mosaic_0001>

<llo_original>
// kernel: inv_layer.1
$region0: #{inv_layer.1}
  #allocation0 [shape = 'u32[]', space=smem, size = 0x4, offset = 0x4, fixed_abs, tag = 'smem constant byte address 0x4 - core index']
  #allocation1 [shape = 'u32[144,128]{1,0:T(1,128)}', space=vmem, size = 0x12000, scoped, tag = 'internal scratch']
  #allocation2 [shape = 'f32[1,128]{1,0:T(1,128)}', space=vmem, size = 0x200, scoped, tag = 'scratch operand']
  %s0 = inlined_call_operand.vmem [shape: bf16[1,128], index: 0, kind: input, shape index: {}]
  %s1 = inlined_call_operand.hbm [shape: bf16[128,128], index: 1, kind: input, shape index: {}]
  %s2 = inlined_call_operand.hbm [shape: bf16[128,128], index: 2, kind: input, shape index: {}]
  %s3 = inlined_call_operand.hbm [shape: bf16[128,128], index: 3, kind: input, shape index: {}]
  %s4 = inlined_call_operand.vmem [shape: f32[1,128], index: 4, kind: input, shape index: {}]
  %s5 = inlined_call_operand.hbm [shape: f32[1,128], index: 5, kind: output, shape index: {}]
  %s6 = sld [smem:[#allocation0]]
  $region50: #{inv_layer.1} parent=0
    _
  %s8 = ssub.s32 1, %s6
  %s9 = scalar_select 0, %s8, %s6
  $region1: #{inv_layer.1} parent=0
    #allocation3 [shape = 'u8[32768]{0}', space=vmem, size = 0x8000, scoped, tag = 'input window, operand 1, single buffered']
    #allocation4 [shape = 's32[1]{0}', space=sflag, size = 0x4, scoped, tag = 'scoped memory for inv_layer.1']
    #allocation5 [shape = 's32[1]{0}', space=sflag, size = 0x4, scoped, tag = 'scoped memory for inv_layer.1']
    #allocation6 [shape = 'u8[32768]{0}', space=vmem, size = 0x8000, scoped, tag = 'input window, operand 2, single buffered']
    #allocation7 [shape = 's32[1]{0}', space=sflag, size = 0x4, scoped, tag = 'scoped memory for inv_layer.1']
    #allocation8 [shape = 'u8[32768]{0}', space=vmem, size = 0x8000, scoped, tag = 'input window, operand 3, single buffered']
    #allocation9 [shape = 'u8[512]{0}', space=vmem, size = 0x400, scoped, tag = 'output window, operand 0, single buffered']
    %10 = vsyncpa [#allocation4], 0
    %11 = vsyncpa [#allocation7], 0
    %12 = vsyncpa [#allocation5], 0
    // Predicated region
    $region2: #{inv_layer.1} parent=1 // pred_check
      _
    $region3: #{inv_layer.1} parent=1 // pred_check_branch
      %14 = sbr.rel (0) target = $region5
    $region4: #{inv_layer.1} parent=1 // pred_region
      _
    $region5: #{inv_layer.1} parent=1 // pred_fallthru
      _
    // Predicated region
    $region6: #{inv_layer.1} parent=1 // pred_check
      _
    $region7: #{inv_layer.1} parent=1 // pred_check_branch
      %16 = sbr.rel (0) target = $region9
    $region8: #{inv_layer.1} parent=1 // pred_region
      %s18 = ssub.s32 1024, 1024
      %19 = vsyncadd [#allocation4], %s18
      %s20 = sshll.u32 [#allocation3], 4
      %s21 = int_to_ptr.vmem [resolvable:$true] %s20
      %26 = dma.hbm_to_vmem [thread:$0]  %s1, 1024, %s21, [#allocation4], 64, 64, 4
    $region9: #{inv_layer.1} parent=1 // pred_fallthru
      _
    // Predicated region
    $region10: #{inv_layer.1} parent=1 // pred_check
      _
    $region11: #{inv_layer.1} parent=1 // pred_check_branch
      %28 = sbr.rel (0) target = $region13
    $region12: #{inv_layer.1} parent=1 // pred_region
      %s30 = ssub.s32 1024, 1024
      %31 = vsyncadd [#allocation7], %s30
      %s32 = sshll.u32 [#allocation6], 4
      %s33 = int_to_ptr.vmem [resolvable:$true] %s32
      %38 = dma.hbm_to_vmem [thread:$0]  %s2, 1024, %s33, [#allocation7], 64, 64, 4
    $region13: #{inv_layer.1} parent=1 // pred_fallthru
      _
    // Predicated region
    $region14: #{inv_layer.1} parent=1 // pred_check
      _
    $region15: #{inv_layer.1} parent=1 // pred_check_branch
      %40 = sbr.rel (0) target = $region17
    $region16: #{inv_layer.1} parent=1 // pred_region
      %s42 = ssub.s32 1024, 1024
      %43 = vsyncadd [#allocation7], %s42
      %s44 = sshll.u32 [#allocation8], 4
      %s45 = int_to_ptr.vmem [resolvable:$true] %s44
      %50 = dma.hbm_to_vmem [thread:$0]  %s3, 1024, %s45, [#allocation7], 64, 64, 4
    $region17: #{inv_layer.1} parent=1 // pred_fallthru
      _
    // Predicated region
    $region18: #{inv_layer.1} parent=1 // pred_check
      _
    $region19: #{inv_layer.1} parent=1 // pred_check_branch
      %52 = sbr.rel (0) target = $region21
    $region20: #{inv_layer.1} parent=1 // pred_region
      _
    $region21: #{inv_layer.1} parent=1 // pred_fallthru
      _
    // Predicated region
    $region22: #{inv_layer.1} parent=1 // pred_check
      _
    $region23: #{inv_layer.1} parent=1 // pred_check_branch
      %54 = sbr.rel (0) target = $region25
    $region24: #{inv_layer.1} parent=1 // pred_region
      %55 = dma.done [#allocation4], 1024
    $region25: #{inv_layer.1} parent=1 // pred_fallthru
      _
    // Predicated region
    $region26: #{inv_layer.1} parent=1 // pred_check
      _
    $region27: #{inv_layer.1} parent=1 // pred_check_branch
      %57 = sbr.rel (0) target = $region29
    $region28: #{inv_layer.1} parent=1 // pred_region
      %58 = dma.done [#allocation7], 1024
    $region29: #{inv_layer.1} parent=1 // pred_fallthru
      _
    // Predicated region
    $region30: #{inv_layer.1} parent=1 // pred_check
      _
    $region31: #{inv_layer.1} parent=1 // pred_check_branch
      %60 = sbr.rel (0) target = $region33
    $region32: #{inv_layer.1} parent=1 // pred_region
      %61 = dma.done [#allocation7], 1024
    $region33: #{inv_layer.1} parent=1 // pred_fallthru
      _
    %p63 = scmp.eq.s32.totalorder 0, 0
    // Predicated region
    $region34: #{inv_layer.1} parent=1 // pred_check
      %p64 = pneg %p63
    $region35: #{inv_layer.1} parent=1 // pred_check_branch
      %66 = sbr.rel (%p64) target = $region37
    $region36: #{inv_layer.1} parent=1 // pred_region
      %v67 = vld [vmem:[%s4] sm:$0x1]
      %68 = vst [vmem:[#allocation2] sm:$0x1] %v67
    $region37: #{inv_layer.1} parent=1 // pred_fallthru
      _
    %v69 = vld [vmem:[%s0] sm:$0x1]
    %s70 = smul.u32 0, 128
    %s71 = sshra.s32 %s70, 7
    %s72 = sand.u32 %s70, 127
    %s73 = scalar_lea.vmem %s0, %s71
    %v74 = vld [vmem:[%s73] sm:$0x1]
    %v75 = vld [vmem:[#allocation3] sm:$0xf]
    %v76 = vld [vmem:[#allocation3 + $0x4] sm:$0xf]
    %v77 = vld [vmem:[#allocation3 + $0x8] sm:$0xf]
    %v78 = vld [vmem:[#allocation3 + $0xc] sm:$0xf]
    %v79 = vld [vmem:[#allocation3 + $0x10] sm:$0xf]
    %v80 = vld [vmem:[#allocation3 + $0x14] sm:$0xf]
    %v81 = vld [vmem:[#allocation3 + $0x18] sm:$0xf]
    %v82 = vld [vmem:[#allocation3 + $0x1c] sm:$0xf]
    %v83 = vld [vmem:[#allocation3 + $0x20] sm:$0xf]
    %v84 = vld [vmem:[#allocation3 + $0x24] sm:$0xf]
    %v85 = vld [vmem:[#allocation3 + $0x28] sm:$0xf]
    %v86 = vld [vmem:[#allocation3 + $0x2c] sm:$0xf]
    %v87 = vld [vmem:[#allocation3 + $0x30] sm:$0xf]
    %v88 = vld [vmem:[#allocation3 + $0x34] sm:$0xf]
    %v89 = vld [vmem:[#allocation3 + $0x38] sm:$0xf]
    %v90 = vld [vmem:[#allocation3 + $0x3c] sm:$0xf]
    %v107 = vunpack.c.l.b16 %v75
    %v108 = vunpack.c.l.b16 %v76
    %v109 = vunpack.c.l.b16 %v77
    %v110 = vunpack.c.l.b16 %v78
    %v111 = vunpack.c.l.b16 %v79
    %v112 = vunpack.c.l.b16 %v80
    %v113 = vunpack.c.l.b16 %v81
    %v114 = vunpack.c.l.b16 %v82
    %v115 = vunpack.c.l.b16 %v83
    %v116 = vunpack.c.l.b16 %v84
    %v117 = vunpack.c.l.b16 %v85
    %v118 = vunpack.c.l.b16 %v86
    %v119 = vunpack.c.l.b16 %v87
    %v120 = vunpack.c.l.b16 %v88
    %v121 = vunpack.c.l.b16 %v89
    %v122 = vunpack.c.l.b16 %v90
    %v123 = vpack.c.b16 %v108, %v107
    %v124 = vpack.c.b16 %v110, %v109
    %v125 = vpack.c.b16 %v112, %v111
    %v126 = vpack.c.b16 %v114, %v113
    %v127 = vpack.c.b16 %v116, %v115
    %v128 = vpack.c.b16 %v118, %v117
    %v129 = vpack.c.b16 %v120, %v119
    %v130 = vpack.c.b16 %v122, %v121
    %139 = vmatprep.subr.bf16.mxu0 0
    %140 = vmatpush1.bf16.xpose.msra.mxu0 %v123
    %141 = vmatprep.subr.bf16.mxu0 0
    %142 = vmatpush1.bf16.xpose.msra.mxu0 %v124
    %143 = vmatprep.subr.bf16.mxu0 0
    %144 = vmatpush1.bf16.xpose.msra.mxu0 %v125
    %145 = vmatprep.subr.bf16.mxu0 0
    %146 = vmatpush1.bf16.xpose.msra.mxu0 %v126
    %147 = vmatprep.subr.bf16.mxu0 0
    %148 = vmatpush1.bf16.xpose.msra.mxu0 %v127
    %149 = vmatprep.subr.bf16.mxu0 0
    %150 = vmatpush1.bf16.xpose.msra.mxu0 %v128
    %151 = vmatprep.subr.bf16.mxu0 0
    %152 = vmatpush1.bf16.xpose.msra.mxu0 %v129
    %153 = vmatprep.subr.bf16.mxu0 0
    %154 = vmatpush1.bf16.xpose.msra.mxu0 %v130
    %155 = vmatprep.subr.bf16.mxu0 0
    %156 = vmatpush1.bf16.xpose.msra.mxu0 0
    %157 = vmatprep.subr.bf16.mxu0 0
    %158 = vmatpush1.bf16.xpose.msra.mxu0 0
    %159 = vmatprep.subr.bf16.mxu0 0
    %160 = vmatpush1.bf16.xpose.msra.mxu0 0
    %161 = vmatprep.subr.bf16.mxu0 0
    %162 = vmatpush1.bf16.xpose.msra.mxu0 0
    %163 = vmatprep.subr.bf16.mxu0 0
    %164 = vmatpush1.bf16.xpose.msra.mxu0 0
    %165 = vmatprep.subr.bf16.mxu0 0
    %166 = vmatpush1.bf16.xpose.msra.mxu0 0
    %167 = vmatprep.subr.bf16.mxu0 0
    %168 = vmatpush1.bf16.xpose.msra.mxu0 0
    %169 = vmatprep.subr.bf16.mxu0 0
    %170 = vmatpush1.bf16.xpose.msra.mxu0 0
    %171 = vmatprep.mubr.bf16.mxu0 0
    %172 = vmatmul.mubr.bf16.gmra.mrb[0].mxu0 %v69
    %v173 = vpop.f32.mrb[0].mxu0
    %v174 = vadd.f32 0.0, %v173
    %v175 = vpop.f32.mrb[0].mxu0
    %v176 = vpop.f32.mrb[0].mxu0
    %v177 = vpop.f32.mrb[0].mxu0
    %178 = vdwg.mxu0
    %v179 = vmax.f32 %v174, 0.0
    %v180 = vpack.c.bf16 %v179, %v179
    %v181 = vld [vmem:[#allocation2] sm:$0x1]
    %v182 = vld [vmem:[#allocation8] sm:$0xf]
    %v183 = vld [vmem:[#allocation8 + $0x4] sm:$0xf]
    %v184 = vld [vmem:[#allocation8 + $0x8] sm:$0xf]
    %v185 = vld [vmem:[#allocation8 + $0xc] sm:$0xf]
    %v186 = vld [vmem:[#allocation8 + $0x10] sm:$0xf]
    %v187 = vld [vmem:[#allocation8 + $0x14] sm:$0xf]
    %v188 = vld [vmem:[#allocation8 + $0x18] sm:$0xf]
    %v189 = vld [vmem:[#allocation8 + $0x1c] sm:$0xf]
    %v190 = vld [vmem:[#allocation8 + $0x20] sm:$0xf]
    %v191 = vld [vmem:[#allocation8 + $0x24] sm:$0xf]
    %v192 = vld [vmem:[#allocation8 + $0x28] sm:$0xf]
    %v193 = vld [vmem:[#allocation8 + $0x2c] sm:$0xf]
    %v194 = vld [vmem:[#allocation8 + $0x30] sm:$0xf]
    %v195 = vld [vmem:[#allocation8 + $0x34] sm:$0xf]
    %v196 = vld [vmem:[#allocation8 + $0x38] sm:$0xf]
    %v197 = vld [vmem:[#allocation8 + $0x3c] sm:$0xf]
    %v198 = vld [vmem:[#allocation6] sm:$0xf]
    %v199 = vld [vmem:[#allocation6 + $0x4] sm:$0xf]
    %v200 = vld [vmem:[#allocation6 + $0x8] sm:$0xf]
    %v201 = vld [vmem:[#allocation6 + $0xc] sm:$0xf]
    %v202 = vld [vmem:[#allocation6 + $0x10] sm:$0xf]
    %v203 = vld [vmem:[#allocation6 + $0x14] sm:$0xf]
    %v204 = vld [vmem:[#allocation6 + $0x18] sm:$0xf]
    %v205 = vld [vmem:[#allocation6 + $0x1c] sm:$0xf]
    %v206 = vld [vmem:[#allocation6 + $0x20] sm:$0xf]
    %v207 = vld [vmem:[#allocation6 + $0x24] sm:$0xf]
    %v208 = vld [vmem:[#allocation6 + $0x28] sm:$0xf]
    %v209 = vld [vmem:[#allocation6 + $0x2c] sm:$0xf]
    %v210 = vld [vmem:[#allocation6 + $0x30] sm:$0xf]
    %v211 = vld [vmem:[#allocation6 + $0x34] sm:$0xf]
    %v212 = vld [vmem:[#allocation6 + $0x38] sm:$0xf]
    %v213 = vld [vmem:[#allocation6 + $0x3c] sm:$0xf]
    %v230 = vunpack.c.l.b16 %v198
    %v231 = vunpack.c.l.b16 %v199
    %v232 = vunpack.c.l.b16 %v200
    %v233 = vunpack.c.l.b16 %v201
    %v234 = vunpack.c.l.b16 %v202
    %v235 = vunpack.c.l.b16 %v203
    %v236 = vunpack.c.l.b16 %v204
    %v237 = vunpack.c.l.b16 %v205
    %v238 = vunpack.c.l.b16 %v206
    %v239 = vunpack.c.l.b16 %v207
    %v240 = vunpack.c.l.b16 %v208
    %v241 = vunpack.c.l.b16 %v209
    %v242 = vunpack.c.l.b16 %v210
    %v243 = vunpack.c.l.b16 %v211
    %v244 = vunpack.c.l.b16 %v212
    %v245 = vunpack.c.l.b16 %v213
    %v246 = vpack.c.b16 %v231, %v230
    %v247 = vpack.c.b16 %v233, %v232
    %v248 = vpack.c.b16 %v235, %v234
    %v249 = vpack.c.b16 %v237, %v236
    %v250 = vpack.c.b16 %v239, %v238
    %v251 = vpack.c.b16 %v241, %v240
    %v252 = vpack.c.b16 %v243, %v242
    %v253 = vpack.c.b16 %v245, %v244
    %262 = vmatprep.subr.bf16.mxu0 0
    %263 = vmatpush1.bf16.msra.mxu0 %v246
    %264 = vmatprep.subr.bf16.mxu0 0
    %265 = vmatpush1.bf16.msra.mxu0 %v247
    %266 = vmatprep.subr.bf16.mxu0 0
    %267 = vmatpush1.bf16.msra.mxu0 %v248
    %268 = vmatprep.subr.bf16.mxu0 0
    %269 = vmatpush1.bf16.msra.mxu0 %v249
    %270 = vmatprep.subr.bf16.mxu0 0
    %271 = vmatpush1.bf16.msra.mxu0 %v250
    %272 = vmatprep.subr.bf16.mxu0 0
    %273 = vmatpush1.bf16.msra.mxu0 %v251
    %274 = vmatprep.subr.bf16.mxu0 0
    %275 = vmatpush1.bf16.msra.mxu0 %v252
    %276 = vmatprep.subr.bf16.mxu0 0
    %277 = vmatpush1.bf16.msra.mxu0 %v253
    %278 = vmatprep.subr.bf16.mxu0 0
    %279 = vmatpush1.bf16.msra.mxu0 0
    %280 = vmatprep.subr.bf16.mxu0 0
    %281 = vmatpush1.bf16.msra.mxu0 0
    %282 = vmatprep.subr.bf16.mxu0 0
    %283 = vmatpush1.bf16.msra.mxu0 0
    %284 = vmatprep.subr.bf16.mxu0 0
    %285 = vmatpush1.bf16.msra.mxu0 0
    %286 = vmatprep.subr.bf16.mxu0 0
    %287 = vmatpush1.bf16.msra.mxu0 0
    %288 = vmatprep.subr.bf16.mxu0 0
    %289 = vmatpush1.bf16.msra.mxu0 0
    %290 = vmatprep.subr.bf16.mxu0 0
    %291 = vmatpush1.bf16.msra.mxu0 0
    %292 = vmatprep.subr.bf16.mxu0 0
    %293 = vmatpush1.bf16.msra.mxu0 0
    %294 = vmatprep.mubr.bf16.mxu0 0
    %295 = vmatmul.mubr.bf16.gmra.mrb[0].mxu0 %v74
    %v296 = vpop.f32.mrb[0].mxu0
    %v297 = vadd.f32 0.0, %v296
    %v298 = vpop.f32.mrb[0].mxu0
    %v299 = vpop.f32.mrb[0].mxu0
    %v300 = vpop.f32.mrb[0].mxu0
    %301 = vdwg.mxu0
    %v318 = vunpack.c.l.b16 %v182
    %v319 = vunpack.c.l.b16 %v183
    %v320 = vunpack.c.l.b16 %v184
    %v321 = vunpack.c.l.b16 %v185
    %v322 = vunpack.c.l.b16 %v186
    %v323 = vunpack.c.l.b16 %v187
    %v324 = vunpack.c.l.b16 %v188
    %v325 = vunpack.c.l.b16 %v189
    %v326 = vunpack.c.l.b16 %v190
    %v327 = vunpack.c.l.b16 %v191
    %v328 = vunpack.c.l.b16 %v192
    %v329 = vunpack.c.l.b16 %v193
    %v330 = vunpack.c.l.b16 %v194
    %v331 = vunpack.c.l.b16 %v195
    %v332 = vunpack.c.l.b16 %v196
    %v333 = vunpack.c.l.b16 %v197
    %v334 = vpack.c.b16 %v319, %v318
    %v335 = vpack.c.b16 %v321, %v320
    %v336 = vpack.c.b16 %v323, %v322
    %v337 = vpack.c.b16 %v325, %v324
    %v338 = vpack.c.b16 %v327, %v326
    %v339 = vpack.c.b16 %v329, %v328
    %v340 = vpack.c.b16 %v331, %v330
    %v341 = vpack.c.b16 %v333, %v332
    %350 = vmatprep.subr.bf16.mxu0 0
    %351 = vmatpush1.bf16.msra.mxu0 %v334
    %352 = vmatprep.subr.bf16.mxu0 0
    %353 = vmatpush1.bf16.msra.mxu0 %v335
    %354 = vmatprep.subr.bf16.mxu0 0
    %355 = vmatpush1.bf16.msra.mxu0 %v336
    %356 = vmatprep.subr.bf16.mxu0 0
    %357 = vmatpush1.bf16.msra.mxu0 %v337
    %358 = vmatprep.subr.bf16.mxu0 0
    %359 = vmatpush1.bf16.msra.mxu0 %v338
    %360 = vmatprep.subr.bf16.mxu0 0
    %361 = vmatpush1.bf16.msra.mxu0 %v339
    %362 = vmatprep.subr.bf16.mxu0 0
    %363 = vmatpush1.bf16.msra.mxu0 %v340
    %364 = vmatprep.subr.bf16.mxu0 0
    %365 = vmatpush1.bf16.msra.mxu0 %v341
    %366 = vmatprep.subr.bf16.mxu0 0
    %367 = vmatpush1.bf16.msra.mxu0 0
    %368 = vmatprep.subr.bf16.mxu0 0
    %369 = vmatpush1.bf16.msra.mxu0 0
    %370 = vmatprep.subr.bf16.mxu0 0
    %371 = vmatpush1.bf16.msra.mxu0 0
    %372 = vmatprep.subr.bf16.mxu0 0
    %373 = vmatpush1.bf16.msra.mxu0 0
    %374 = vmatprep.subr.bf16.mxu0 0
    %375 = vmatpush1.bf16.msra.mxu0 0
    %376 = vmatprep.subr.bf16.mxu0 0
    %377 = vmatpush1.bf16.msra.mxu0 0
    %378 = vmatprep.subr.bf16.mxu0 0
    %379 = vmatpush1.bf16.msra.mxu0 0
    %380 = vmatprep.subr.bf16.mxu0 0
    %381 = vmatpush1.bf16.msra.mxu0 0
    %382 = vmatprep.mubr.bf16.mxu0 0
    %383 = vmatmul.mubr.bf16.gmra.mrb[0].mxu0 %v180
    %v384 = vpop.f32.mrb[0].mxu0
    %v385 = vadd.f32 %v297, %v384
    %v386 = vpop.f32.mrb[0].mxu0
    %v387 = vpop.f32.mrb[0].mxu0
    %v388 = vpop.f32.mrb[0].mxu0
    %389 = vdwg.mxu0
    %v390 = vadd.f32 %v181, %v385
    %391 = vst [vmem:[#allocation2] sm:$0x1] %v390
    // Predicated region
    $region38: #{inv_layer.1} parent=1 // pred_check
      %p392 = pneg %p63
    $region39: #{inv_layer.1} parent=1 // pred_check_branch
      %394 = sbr.rel (%p392) target = $region41
    $region40: #{inv_layer.1} parent=1 // pred_region
      %v395 = vld [vmem:[#allocation2] sm:$0x1]
      %v396 = vmul.f32 %v395, %v395
      %vm397 = vcmask 1040384
      %v398 = vsel %vm397, %v396, 0.0
      %399 = vadd.xlane.f32.xlu0 %v398
      %v400 = vpop.xlane.xlu0 %399
      %v401 = vmax.f32 %v400, 1e-24
      %v402 = vrsqrt.pop %v401
      %v403 = vmul.f32 %v395, %v402
      %404 = vst [vmem:[#allocation9] sm:$0x1] %v403
    $region41: #{inv_layer.1} parent=1 // pred_fallthru
      _
    // Predicated region
    $region42: #{inv_layer.1} parent=1 // pred_check
      _
    $region43: #{inv_layer.1} parent=1 // pred_check_branch
      %406 = sbr.rel (0) target = $region45
    $region44: #{inv_layer.1} parent=1 // pred_region
      %s408 = ssub.s32 16, 16
      %409 = vsyncadd [#allocation5], %s408
      %s411 = sshll.u32 [#allocation9], 4
      %s412 = int_to_ptr.vmem [resolvable:$true] %s411
      %414 = dma.vmem_to_hbm [thread:$0]  %s412, 16, %s5, [#allocation5]
    $region45: #{inv_layer.1} parent=1 // pred_fallthru
      _
    // Predicated region
    $region46: #{inv_layer.1} parent=1 // pred_check
      _
    $region47: #{inv_layer.1} parent=1 // pred_check_branch
      %416 = sbr.rel (0) target = $region49
    $region48: #{inv_layer.1} parent=1 // pred_region
      %417 = dma.done [#allocation5], 16
    $region49: #{inv_layer.1} parent=1 // pred_fallthru
      _
    %418 = vsyncpa [#allocation4], 1
    %419 = vsyncpa [#allocation7], 1
    %420 = vsyncpa [#allocation5], 1

</llo_original>
